<compile_context>
chip_gen: v6e
topology: v6e:2x2x1
jax: 0.10.0
libtpu: 0.0.40
codegen_flags: <defaults>
</compile_context>

<pallas_src>
import functools

import jax
import jax.numpy as jnp
from jax.experimental import pallas as pl
from jax.experimental.pallas import tpu as pltpu

_LANE = 128
_TARGET_BLOCK_BYTES = 4 * 1024 * 1024      # per-step input tile (good on v7x HBM too)
_VMEM_LIVE_BUDGET = 24 * 1024 * 1024       # conservative live-set cap (v5e/v6e/v7x)
_STATIC_UNROLL_LIMIT = 32                  # static python loop up to this many channels


def edge_map_kernel(x_ref, o_ref, *acc_refs, inv_scale, w_valid, n_cblocks):
    # x_ref: (1, Cb, H, Wp) channel block; o_ref: (1, 1, H, Wp) edge map.
    _, Cb, H, Wp = x_ref.shape
    c = pl.program_id(1)

    def accum_channel(x, dh_sum, dw_sum):
        # Forward differences via XLU roll (shift = dim-1 == jnp.roll(x, -1)):
        #   dh[h] = |x[h+1] - x[h]|,  dw[:, w] = |x[:, w+1] - x[:, w]|.
        # The wrapped boundary row/col garbage is cleaned up once at finalize.
        # Diff/abs stay in the input dtype (bf16 on v6e/v7x); upcast on the add.
        dh = jnp.abs(pltpu.roll(x, shift=H - 1, axis=0) - x)
        dw = jnp.abs(pltpu.roll(x, shift=Wp - 1, axis=1) - x)
        return dh_sum + dh.astype(jnp.float32), dw_sum + dw.astype(jnp.float32)

    dh_sum = jnp.zeros((H, Wp), jnp.float32)
    dw_sum = jnp.zeros((H, Wp), jnp.float32)
    if Cb <= _STATIC_UNROLL_LIMIT:
        for cc in range(Cb):
            dh_sum, dw_sum = accum_channel(x_ref[0, cc], dh_sum, dw_sum)
    else:
        def body(cc, carry):
            return accum_channel(x_ref[0, cc], *carry)
        dh_sum, dw_sum = jax.lax.fori_loop(0, Cb, body, (dh_sum, dw_sum))

    def finalize(ax, ay):
        rows = jax.lax.broadcasted_iota(jnp.int32, (H, Wp), 0)
        cols = jax.lax.broadcasted_iota(jnp.int32, (H, Wp), 1)
        # Zero the roll-wrap garbage: last row for the H-diff, last *valid*
        # column onward for the W-diff (this also kills any W zero-padding).
        ax = jnp.where(rows == H - 1, 0.0, ax)
        ay = jnp.where(cols >= w_valid - 1, 0.0, ay)
        # gradX[:-1] += gradx ; gradX[1:] += gradx  via a +1 roll (the wrap
        # contributes 0 because the padded row/col of ax/ay is zero), then
        # interior rows/cols are halved with a 0.5/1.0 weight mask.
        gX = ax + pltpu.roll(ax, shift=1, axis=0)
        gY = ay + pltpu.roll(ay, shift=1, axis=1)
        wr = jnp.where((rows >= 1) & (rows <= H - 2), 0.5, 1.0).astype(jnp.float32)
        wc = jnp.where((cols >= 1) & (cols <= w_valid - 2), 0.5, 1.0).astype(jnp.float32)
        edge = (gX * wr + gY * wc) * inv_scale
        o_ref[0, 0] = edge.astype(o_ref.dtype)

    if n_cblocks == 1:
        # Single channel block: no VMEM accumulators needed at all.
        finalize(dh_sum, dw_sum)
    else:
        acc_x_ref, acc_y_ref = acc_refs

        @pl.when(c == 0)
        def _init():
            acc_x_ref[...] = dh_sum
            acc_y_ref[...] = dw_sum

        @pl.when(c != 0)
        def _accumulate():
            acc_x_ref[...] += dh_sum
            acc_y_ref[...] += dw_sum

        @pl.when(c == n_cblocks - 1)
        def _finalize():
            finalize(acc_x_ref[...], acc_y_ref[...])


def edge_map(img, scale=1.0, *, block_channels=None):
    """img: (N, C, H, W) float array -> (N, 1, H, W) edge map, same semantics
    as the PyTorch EdgeMap module. `block_channels` optionally overrides the
    auto-chosen channel block size (mainly for testing the multi-block path)."""
    N, C, H, W = img.shape
    in_isz = jnp.dtype(img.dtype).itemsize
    out_isz = in_isz

    # Lane-dense last dim: pad W to a multiple of 128 when it costs <= 25%
    # extra HBM traffic; otherwise keep W (masked partial stores, still exact).
    pad_w = (-W) % _LANE
    Wp = W + pad_w if (pad_w and 4 * pad_w <= W) else W

    plane_in = H * Wp * in_isz
    # Per-step VMEM live set: double-buffered input block + double-buffered
    # output block + two f32 accumulators (worst case).
    fixed_bytes = 2 * H * Wp * out_isz + 2 * H * Wp * 4

    if block_channels is not None:
        cb = max(1, min(int(block_channels), C))
    else:
        if _VMEM_LIVE_BUDGET > fixed_bytes:
            cb_budget = max(1, (_VMEM_LIVE_BUDGET - fixed_bytes) // (2 * plane_in))
        else:
            cb_budget = 1
        cb_target = max(1, _TARGET_BLOCK_BYTES // plane_in)
        cb = int(min(C, cb_budget, cb_target))
    n_cblocks = -(-C // cb)
    Cp = n_cblocks * cb

    # Zero padding is exact: a constant-zero channel contributes |0 - 0| = 0 to
    # both gradient sums, and padded W columns are masked at finalize and
    # stripped below.
    if (Cp, Wp) != (C, W):
        img = jnp.pad(img, ((0, 0), (0, Cp - C), (0, 0), (0, Wp - W)))

    live_bytes = 2 * cb * plane_in + fixed_bytes
    vmem_limit = int(min(max(live_bytes + (8 << 20), 32 << 20), 48 << 20))

    # |a/s - b/s| == |a - b| * |1/s|  =>  fold the scale into one final vmul.
    inv_scale = abs(1.0 / float(scale))
    kernel = functools.partial(edge_map_kernel, inv_scale=inv_scale,
                               w_valid=W, n_cblocks=n_cblocks)

    scratch_shapes = []
    if n_cblocks > 1:
        scratch_shapes = [pltpu.VMEM((H, Wp), jnp.float32),   # channel-summed |dH|
                          pltpu.VMEM((H, Wp), jnp.float32)]   # channel-summed |dW|

    cost = pl.CostEstimate(
        flops=int(6 * N * Cp * H * Wp),
        transcendentals=0,
        bytes_accessed=int((N * Cp * H * Wp + N * H * Wp) * in_isz),
    )

    out = pl.pallas_call(
        kernel,
        out_shape=jax.ShapeDtypeStruct((N, 1, H, Wp), img.dtype),
        grid_spec=pltpu.PrefetchScalarGridSpec(
            num_scalar_prefetch=0,
            grid=(N, n_cblocks),
            in_specs=[pl.BlockSpec((1, cb, H, Wp), lambda n, c: (n, c, 0, 0))],
            out_specs=pl.BlockSpec((1, 1, H, Wp), lambda n, c: (n, 0, 0, 0)),
            scratch_shapes=scratch_shapes,
        ),
        compiler_params=pltpu.CompilerParams(
            dimension_semantics=("parallel", "arbitrary"),
            vmem_limit_bytes=vmem_limit,
        ),
        cost_estimate=cost,
    )(img)

    if Wp != W:
        out = out[..., :W]
    return out


def edge_map_ref(img, scale=1.0):
    """Pure-JAX reference mirroring the PyTorch forward."""
    img = img / scale
    N, C, H, W = img.shape
    gradx = jnp.sum(jnp.abs(img[:, :, 1:, :] - img[:, :, :-1, :]), axis=1,
                    keepdims=True)
    grady = jnp.sum(jnp.abs(img[:, :, :, 1:] - img[:, :, :, :-1]), axis=1,
                    keepdims=True)
    gradX = jnp.zeros((N, 1, H, W), img.dtype)
    gradX = gradX.at[:, :, :-1, :].add(gradx)
    gradX = gradX.at[:, :, 1:, :].add(gradx)
    gradX = gradX.at[:, :, 1:-1, :].divide(2)
    gradY = jnp.zeros((N, 1, H, W), img.dtype)
    gradY = gradY.at[:, :, :, :-1].add(grady)
    gradY = gradY.at[:, :, :, 1:].add(grady)
    gradY = gradY.at[:, :, :, 1:-1].divide(2)
    return gradX + gradY


if __name__ == "__main__":
    key = jax.random.PRNGKey(0)

    # Case 1: small canonical shape, single channel block, no padding paths.
    N, C, H, W = 2, 4, 16, 16
    img1 = jax.random.normal(key, (N, C, H, W), dtype=jnp.float32)
    out1 = jax.block_until_ready(edge_map(img1, scale=1.0))
    ref1 = edge_map_ref(img1, scale=1.0)
    assert out1.shape == (N, 1, H, W)
    assert jnp.allclose(out1, ref1, atol=1e-5, rtol=1e-5)

    # Case 2: exercises non-unit scale, W padding to a lane multiple
    # (240 -> 256), channel zero-padding (8 -> 9) and the multi-block
    # accumulator path (3 channel blocks).
    key2 = jax.random.PRNGKey(0)
    img2 = jax.random.normal(key2, (1, 8, 24, 240), dtype=jnp.float32)
    out2 = jax.block_until_ready(edge_map(img2, scale=2.0, block_channels=3))
    ref2 = edge_map_ref(img2, scale=2.0)
    assert out2.shape == (1, 1, 24, 240)
    assert jnp.allclose(out2, ref2, atol=1e-5, rtol=1e-5)

    print("KERNEL_OK")
</pallas_src>

<mosaic_0001>
module attributes {stable_mosaic.version = 11 : i64} {
  func.func @edge_map_kernel(%arg0: i32, %arg1: i32, %arg2: memref<1x4x16x16xf32, #tpu.memory_space<vmem>>, %arg3: memref<1x1x16x16xf32, #tpu.memory_space<vmem>>) attributes {dimension_semantics = [#tpu.dimension_semantics<parallel>, #tpu.dimension_semantics<arbitrary>], iteration_bounds = array<i64: 2, 1>, scalar_prefetch = 0 : i64, scratch_operands = 0 : i64, tpu.core_type = #tpu.core_type<tc>, window_params = [{transform_indices = @transform_0, window_bounds = array<i64: 1, 4, 16, 16>}, {transform_indices = @transform_1, window_bounds = array<i64: 1, 1, 16, 16>}]} {
    %cst = arith.constant 0.000000e+00 : f32
    %0 = vector.broadcast %cst : f32 to vector<16x16xf32>
    %cst_0 = arith.constant 0.000000e+00 : f32
    %1 = vector.broadcast %cst_0 : f32 to vector<16x16xf32>
    %c0 = arith.constant 0 : index
    %c0_1 = arith.constant 0 : index
    %c0_2 = arith.constant 0 : index
    %c0_3 = arith.constant 0 : index
    %2 = vector.load %arg2[%c0, %c0_1, %c0_2, %c0_3] : memref<1x4x16x16xf32, #tpu.memory_space<vmem>>, vector<1x1x16x16xf32>
    %3 = vector.shape_cast %2 : vector<1x1x16x16xf32> to vector<16x16xf32>
    %c15_i32 = arith.constant 15 : i32
    %4 = tpu.dynamic_rotate %3 by %c15_i32 dim 0 : vector<16x16xf32>, i32 -> vector<16x16xf32>
    %5 = arith.subf %4, %3 : vector<16x16xf32>
    %6 = math.absf %5 : vector<16x16xf32>
    %c15_i32_4 = arith.constant 15 : i32
    %7 = tpu.dynamic_rotate %3 by %c15_i32_4 dim 1 : vector<16x16xf32>, i32 -> vector<16x16xf32>
    %8 = arith.subf %7, %3 : vector<16x16xf32>
    %9 = math.absf %8 : vector<16x16xf32>
    %10 = arith.addf %0, %6 : vector<16x16xf32>
    %11 = arith.addf %1, %9 : vector<16x16xf32>
    %c0_5 = arith.constant 0 : index
    %c1 = arith.constant 1 : index
    %c0_6 = arith.constant 0 : index
    %c0_7 = arith.constant 0 : index
    %12 = vector.load %arg2[%c0_5, %c1, %c0_6, %c0_7] : memref<1x4x16x16xf32, #tpu.memory_space<vmem>>, vector<1x1x16x16xf32>
    %13 = vector.shape_cast %12 : vector<1x1x16x16xf32> to vector<16x16xf32>
    %c15_i32_8 = arith.constant 15 : i32
    %14 = tpu.dynamic_rotate %13 by %c15_i32_8 dim 0 : vector<16x16xf32>, i32 -> vector<16x16xf32>
    %15 = arith.subf %14, %13 : vector<16x16xf32>
    %16 = math.absf %15 : vector<16x16xf32>
    %c15_i32_9 = arith.constant 15 : i32
    %17 = tpu.dynamic_rotate %13 by %c15_i32_9 dim 1 : vector<16x16xf32>, i32 -> vector<16x16xf32>
    %18 = arith.subf %17, %13 : vector<16x16xf32>
    %19 = math.absf %18 : vector<16x16xf32>
    %20 = arith.addf %10, %16 : vector<16x16xf32>
    %21 = arith.addf %11, %19 : vector<16x16xf32>
    %c0_10 = arith.constant 0 : index
    %c2 = arith.constant 2 : index
    %c0_11 = arith.constant 0 : index
    %c0_12 = arith.constant 0 : index
    %22 = vector.load %arg2[%c0_10, %c2, %c0_11, %c0_12] : memref<1x4x16x16xf32, #tpu.memory_space<vmem>>, vector<1x1x16x16xf32>
    %23 = vector.shape_cast %22 : vector<1x1x16x16xf32> to vector<16x16xf32>
    %c15_i32_13 = arith.constant 15 : i32
    %24 = tpu.dynamic_rotate %23 by %c15_i32_13 dim 0 : vector<16x16xf32>, i32 -> vector<16x16xf32>
    %25 = arith.subf %24, %23 : vector<16x16xf32>
    %26 = math.absf %25 : vector<16x16xf32>
    %c15_i32_14 = arith.constant 15 : i32
    %27 = tpu.dynamic_rotate %23 by %c15_i32_14 dim 1 : vector<16x16xf32>, i32 -> vector<16x16xf32>
    %28 = arith.subf %27, %23 : vector<16x16xf32>
    %29 = math.absf %28 : vector<16x16xf32>
    %30 = arith.addf %20, %26 : vector<16x16xf32>
    %31 = arith.addf %21, %29 : vector<16x16xf32>
    %c0_15 = arith.constant 0 : index
    %c3 = arith.constant 3 : index
    %c0_16 = arith.constant 0 : index
    %c0_17 = arith.constant 0 : index
    %32 = vector.load %arg2[%c0_15, %c3, %c0_16, %c0_17] : memref<1x4x16x16xf32, #tpu.memory_space<vmem>>, vector<1x1x16x16xf32>
    %33 = vector.shape_cast %32 : vector<1x1x16x16xf32> to vector<16x16xf32>
    %c15_i32_18 = arith.constant 15 : i32
    %34 = tpu.dynamic_rotate %33 by %c15_i32_18 dim 0 : vector<16x16xf32>, i32 -> vector<16x16xf32>
    %35 = arith.subf %34, %33 : vector<16x16xf32>
    %36 = math.absf %35 : vector<16x16xf32>
    %c15_i32_19 = arith.constant 15 : i32
    %37 = tpu.dynamic_rotate %33 by %c15_i32_19 dim 1 : vector<16x16xf32>, i32 -> vector<16x16xf32>
    %38 = arith.subf %37, %33 : vector<16x16xf32>
    %39 = math.absf %38 : vector<16x16xf32>
    %40 = arith.addf %30, %36 : vector<16x16xf32>
    %41 = arith.addf %31, %39 : vector<16x16xf32>
    %42 = tpu.iota {dimensions = array<i32: 0>} : vector<16x16xi32>
    %43 = tpu.iota {dimensions = array<i32: 1>} : vector<16x16xi32>
    %c15_i32_20 = arith.constant 15 : i32
    %44 = vector.broadcast %c15_i32_20 : i32 to vector<16x16xi32>
    %45 = arith.cmpi eq, %42, %44 : vector<16x16xi32>
    %cst_21 = arith.constant 0.000000e+00 : f32
    %46 = vector.broadcast %cst_21 : f32 to vector<16x16xf32>
    %47 = arith.select %45, %46, %40 : vector<16x16xi1>, vector<16x16xf32>
    %c15_i32_22 = arith.constant 15 : i32
    %48 = vector.broadcast %c15_i32_22 : i32 to vector<16x16xi32>
    %49 = arith.cmpi sge, %43, %48 : vector<16x16xi32>
    %cst_23 = arith.constant 0.000000e+00 : f32
    %50 = vector.broadcast %cst_23 : f32 to vector<16x16xf32>
    %51 = arith.select %49, %50, %41 : vector<16x16xi1>, vector<16x16xf32>
    %c1_i32 = arith.constant 1 : i32
    %52 = tpu.dynamic_rotate %47 by %c1_i32 dim 0 : vector<16x16xf32>, i32 -> vector<16x16xf32>
    %53 = arith.addf %47, %52 : vector<16x16xf32>
    %c1_i32_24 = arith.constant 1 : i32
    %54 = tpu.dynamic_rotate %51 by %c1_i32_24 dim 1 : vector<16x16xf32>, i32 -> vector<16x16xf32>
    %55 = arith.addf %51, %54 : vector<16x16xf32>
    %c1_i32_25 = arith.constant 1 : i32
    %56 = vector.broadcast %c1_i32_25 : i32 to vector<16x16xi32>
    %57 = arith.cmpi sge, %42, %56 : vector<16x16xi32>
    %c14_i32 = arith.constant 14 : i32
    %58 = vector.broadcast %c14_i32 : i32 to vector<16x16xi32>
    %59 = arith.cmpi sle, %42, %58 : vector<16x16xi32>
    %60 = arith.andi %57, %59 : vector<16x16xi1>
    %cst_26 = arith.constant 5.000000e-01 : f32
    %cst_27 = arith.constant 1.000000e+00 : f32
    %61 = vector.broadcast %cst_26 : f32 to vector<16x16xf32>
    %62 = vector.broadcast %cst_27 : f32 to vector<16x16xf32>
    %63 = arith.select %60, %61, %62 : vector<16x16xi1>, vector<16x16xf32>
    %c1_i32_28 = arith.constant 1 : i32
    %64 = vector.broadcast %c1_i32_28 : i32 to vector<16x16xi32>
    %65 = arith.cmpi sge, %43, %64 : vector<16x16xi32>
    %c14_i32_29 = arith.constant 14 : i32
    %66 = vector.broadcast %c14_i32_29 : i32 to vector<16x16xi32>
    %67 = arith.cmpi sle, %43, %66 : vector<16x16xi32>
    %68 = arith.andi %65, %67 : vector<16x16xi1>
    %cst_30 = arith.constant 5.000000e-01 : f32
    %cst_31 = arith.constant 1.000000e+00 : f32
    %69 = vector.broadcast %cst_30 : f32 to vector<16x16xf32>
    %70 = vector.broadcast %cst_31 : f32 to vector<16x16xf32>
    %71 = arith.select %68, %69, %70 : vector<16x16xi1>, vector<16x16xf32>
    %72 = arith.mulf %53, %63 : vector<16x16xf32>
    %73 = arith.mulf %55, %71 : vector<16x16xf32>
    %74 = arith.addf %72, %73 : vector<16x16xf32>
    %cst_32 = arith.constant 1.000000e+00 : f32
    %75 = vector.broadcast %cst_32 : f32 to vector<16x16xf32>
    %76 = arith.mulf %74, %75 : vector<16x16xf32>
    %c0_33 = arith.constant 0 : index
    %c0_34 = arith.constant 0 : index
    %c0_35 = arith.constant 0 : index
    %c0_36 = arith.constant 0 : index
    %77 = vector.load %arg3[%c0_33, %c0_34, %c0_35, %c0_36] : memref<1x1x16x16xf32, #tpu.memory_space<vmem>>, vector<1x1x16x16xf32>
    %78 = vector.shape_cast %77 : vector<1x1x16x16xf32> to vector<16x16xf32>
    %79 = vector.shape_cast %76 : vector<16x16xf32> to vector<1x1x16x16xf32>
    tpu.vector_store %arg3[%c0_33, %c0_34, %c0_35, %c0_36], %79 {strides = array<i32>} : memref<1x1x16x16xf32, #tpu.memory_space<vmem>>, vector<1x1x16x16xf32>,
    return
  }
  func.func @transform_0(%arg0: i32, %arg1: i32) -> (i32, i32, i32, i32) {
    %c0_i32 = arith.constant 0 : i32
    %c0_i32_0 = arith.constant 0 : i32
    %c0_i32_1 = arith.constant 0 : i32
    return %arg0, %arg1, %c0_i32, %c0_i32_0 : i32, i32, i32, i32
  }
  func.func @transform_1(%arg0: i32, %arg1: i32) -> (i32, i32, i32, i32) {
    %c0_i32 = arith.constant 0 : i32
    %c0_i32_0 = arith.constant 0 : i32
    %c0_i32_1 = arith.constant 0 : i32
    %c0_i32_2 = arith.constant 0 : i32
    return %arg0, %c0_i32, %c0_i32_0, %c0_i32_1 : i32, i32, i32, i32
  }
}

</mosaic_0001>

<llo_original>
// kernel: tpu_custom_call.1
$region0: #{tpu_custom_call.1}
  #allocation0 [shape = 'u32[]', space=smem, size = 0x4, offset = 0x4, fixed_abs, tag = 'smem constant byte address 0x4 - core index']
  #allocation1 [shape = 'u32[144,128]{1,0:T(1,128)}', space=vmem, size = 0x12000, scoped, tag = 'internal scratch']
  %s0 = inlined_call_operand.hbm [shape: f32[2,4,16,16], index: 0, kind: input, shape index: {}]
  %s1 = inlined_call_operand.hbm [shape: f32[2,1,16,16], index: 1, kind: output, shape index: {}]
  %s2 = sld [smem:[#allocation0]]
  $region41: #{tpu_custom_call.1} parent=0
    _
  %s4 = ssub.s32 1, %s2
  %s5 = scalar_select 0, %s4, %s2
  $region1: #{tpu_custom_call.1} parent=0
    #allocation2 [shape = 'u8[65536]{0}', space=vmem, size = 0x10000, scoped, tag = 'input window, operand 0']
    #allocation3 [shape = 's32[2]{0}', space=sflag, size = 0x8, scoped, tag = 'scoped memory for tpu_custom_call.1']
    #allocation4 [shape = 's32[2]{0}', space=sflag, size = 0x8, scoped, tag = 'scoped memory for tpu_custom_call.1']
    #allocation5 [shape = 'u8[16384]{0}', space=vmem, size = 0x4000, scoped, tag = 'output window, operand 0']
    %6 = vsyncpa [#allocation3], 0
    %s7 = scalar_lea.sflag [#allocation3], 1
    %8 = vsyncpa %s7, 0
    %9 = vsyncpa [#allocation4], 0
    %s10 = scalar_lea.sflag [#allocation4], 1
    %11 = vsyncpa %s10, 0
    loop: start=0, step=1, limit=4
    $region2: #{tpu_custom_call.1} parent=1 // loop_pre_header
      _
    $region3: #{tpu_custom_call.1} parent=1 // loop_header
      %s13 = sphi 0, %s17
      %p14 = scmp.ge.s32.totalorder %s13, 4
      %s20 = sphi 0, %s32
      %s21 = sphi 0, %s28
      %s22 = sphi 0, %s20
      %s23 = sphi 0, %s21
      %s24 = sphi 0, %s22
      %s25 = sphi 0, %s23
      %s37 = sphi 0, %s39
      %s40 = sphi 0, %s37
      %s41 = sphi 0, %s40
      %s57 = sphi 0, %s41
      %s63 = sphi 0, %s65
      %s66 = sphi 0, %s63
      %s67 = sphi 0, %s66
      %s83 = sphi 0, %s67
    $region4: #{tpu_custom_call.1} parent=1 // loop_header_branch
      %16 = sbr.rel (%p14) target = $region8
    $region5: #{tpu_custom_call.1} parent=1 // loop_body
      %s18 = ssub.s32 %s13, 1
      %s19 = ssub.s32 %s13, 2
      %s26 = sadd.s32 1, %s21
      %p27 = scmp.ge.s32.totalorder %s26, 1
      %s28 = scalar_select %p27, 0, %s26
      %s29 = sadd.s32 1, %s20
      %s30 = scalar_select %p27, %s29, %s20
      %p31 = scmp.ge.s32.totalorder %s30, 2
      %s32 = scalar_select %p31, 0, %s30
      %s33 = ssub.s32 %s20, %s32
      %s34 = ssub.s32 %s21, %s28
      %s35 = sor.u32 %s33, %s34
      %p36 = scmp.eq.s32.totalorder %s35, 0
      %s38 = sadd.s32 %s37, 1
      %s39 = scalar_select %p36, %s37, %s38
      %p42 = pneg %p36
      %p43 = scmp.eq.s32.totalorder %s13, 1
      %p44 = por %p42, %p43
      %p45 = scmp.ne.s32.totalorder %s37, %s40
      %p46 = scmp.eq.s32.totalorder %s13, 0
      %p47 = por %p45, %p46
      %p48 = scmp.ne.s32.totalorder %s37, %s40
      %p49 = scmp.eq.s32.totalorder %s18, 1
      %p50 = por %p48, %p49
      %p51 = scmp.ne.s32.totalorder %s40, %s41
      %p52 = scmp.eq.s32.totalorder %s18, 0
      %p53 = por %p51, %p52
      %p54 = scmp.ne.s32.totalorder %s40, %s41
      %p55 = scmp.eq.s32.totalorder %s19, 1
      %p56 = por %p54, %p55
      %p58 = scmp.ne.s32.totalorder %s41, %s57
      %p59 = scmp.eq.s32.totalorder %s19, 0
      %p60 = por %p58, %p59
      %s61 = ssub.s32 %s20, %s32
      %p62 = scmp.eq.s32.totalorder %s61, 0
      %s64 = sadd.s32 %s63, 1
      %s65 = scalar_select %p62, %s63, %s64
      %p68 = pneg %p62
      %p69 = scmp.eq.s32.totalorder %s13, 1
      %p70 = por %p68, %p69
      %p71 = scmp.ne.s32.totalorder %s63, %s66
      %p72 = scmp.eq.s32.totalorder %s13, 0
      %p73 = por %p71, %p72
      %p74 = scmp.ne.s32.totalorder %s63, %s66
      %p75 = scmp.eq.s32.totalorder %s18, 1
      %p76 = por %p74, %p75
      %p77 = scmp.ne.s32.totalorder %s66, %s67
      %p78 = scmp.eq.s32.totalorder %s18, 0
      %p79 = por %p77, %p78
      %p80 = scmp.ne.s32.totalorder %s66, %s67
      %p81 = scmp.eq.s32.totalorder %s19, 1
      %p82 = por %p80, %p81
      %p84 = scmp.ne.s32.totalorder %s67, %s83
      %p85 = scmp.eq.s32.totalorder %s19, 0
      %p86 = por %p84, %p85
      %p87 = scmp.le.s32.totalorder 1, %s13
      %p88 = scmp.lt.s32.totalorder %s13, 3
      %p89 = pnand %p87, %p88
      %p90 = pneg %p89
      // Predicated region
      $region9: #{tpu_custom_call.1} parent=5 // pred_check
        _
      $region10: #{tpu_custom_call.1} parent=5 // pred_check_branch
        %92 = sbr.rel (%p89) target = $region12
      $region11: #{tpu_custom_call.1} parent=5 // pred_region
        %s93 = ssub.s32 %s13, 1
      $region12: #{tpu_custom_call.1} parent=5 // pred_fallthru
        _
      %p94 = scmp.lt.s32.totalorder %s13, 2
      // Predicated region
      $region13: #{tpu_custom_call.1} parent=5 // pred_check
        %p95 = pneg %p94
      $region14: #{tpu_custom_call.1} parent=5 // pred_check_branch
        %97 = sbr.rel (%p95) target = $region16
      $region15: #{tpu_custom_call.1} parent=5 // pred_region
        // Predicated region
        $region17: #{tpu_custom_call.1} parent=15 // pred_check
          %p98 = pneg %p47
        $region18: #{tpu_custom_call.1} parent=15 // pred_check_branch
          %100 = sbr.rel (%p98) target = $region20
        $region19: #{tpu_custom_call.1} parent=15 // pred_region
          %s101 = sand.u32 %s37, 1
          %s102 = scalar_lea.sflag [#allocation3], %s101
          %s103 = sand.u32 %s37, 1
          %s104 = smul.addr %s103, 64
          %s105 = scalar_lea.vmem [#allocation2], %s104
          %s106 = smul.u32 4, %s21
          %s108 = ssub.s32 1024, 1024
          %109 = vsyncadd %s102, %s108
          %s110 = smul.addr %s106, 2
          %s111 = smul.addr %s20, 8
          %s112 = sadd.s32 %s110, %s111
          %s113 = smul.addr %s112, 128
          %s114 = scalar_lea.hbm %s0, %s113
          %s115 = sshll.u32 %s105, 4
          %s116 = int_to_ptr.vmem [resolvable:$true] %s115
          %121 = dma.hbm_to_vmem [thread:$0]  %s114, 1024, %s116, %s102, 128, 128, 8
        $region20: #{tpu_custom_call.1} parent=15 // pred_fallthru
          _
      $region16: #{tpu_custom_call.1} parent=5 // pred_fallthru
        _
      %p122 = scmp.le.s32.totalorder 1, %s13
      %p123 = scmp.lt.s32.totalorder %s13, 3
      %p124 = pnand %p122, %p123
      %p125 = pneg %p124
      // Predicated region
      $region21: #{tpu_custom_call.1} parent=5 // pred_check
        _
      $region22: #{tpu_custom_call.1} parent=5 // pred_check_branch
        %127 = sbr.rel (%p124) target = $region24
      $region23: #{tpu_custom_call.1} parent=5 // pred_region
        %s128 = ssub.s32 %s13, 1
        %s129 = sand.u32 %s40, 1
        %s130 = scalar_lea.sflag [#allocation3], %s129
        %s131 = sand.u32 %s40, 1
        %s132 = smul.addr %s131, 64
        %s133 = scalar_lea.vmem [#allocation2], %s132
        // Predicated region
        $region25: #{tpu_custom_call.1} parent=23 // pred_check
          %p134 = pneg %p53
        $region26: #{tpu_custom_call.1} parent=23 // pred_check_branch
          %136 = sbr.rel (%p134) target = $region28
        $region27: #{tpu_custom_call.1} parent=23 // pred_region
          %137 = dma.done %s130, 1024
        $region28: #{tpu_custom_call.1} parent=23 // pred_fallthru
          _
        %s138 = sand.u32 %s40, 1
        %s139 = scalar_lea.sflag [#allocation3], %s138
        %s140 = sand.u32 %s40, 1
        %s141 = smul.addr %s140, 64
        %s142 = scalar_lea.vmem [#allocation2], %s141
        %p143 = pneg %p53
        %p144 = pneg %p50
        %p145 = pneg %p79
        %p146 = pneg %p76
        %s147 = sand.u32 %s66, 1
        %s148 = scalar_lea.sflag [#allocation4], %s147
        %s149 = sand.u32 %s66, 1
        %s150 = smul.addr %s149, 16
        %s151 = scalar_lea.vmem [#allocation5], %s150
        %s152 = smul.u32 4, %s23
        %v153 = vld [vmem:[%s133] sm:$0xff]
        %v154 = vld [vmem:[%s133 + $0x8] sm:$0xff]
        %v155 = vrot.slane %v153, 1
        %v156 = vrot.slane %v154, 1
        %v157 = vlaneseq
        %v158 = vshrl.u32 %v157, 7
        %vm159 = vcmp.lt.s32.totalorder %v158, 7
        %v160 = vsel %vm159, %v155, %v156
        %v161 = vsel %vm159, %v156, %v155
        %v162 = vsub.f32 %v160, %v153
        %v163 = vsub.f32 %v161, %v154
        %v164 = vand.u32 2147483647, %v162
        %v165 = vand.u32 2147483647, %v163
        %vm166 = vcmask 1047680
        %167 = vrot.lane.b32.xlu0 %v153, 16
        %v168 = vpop.permute.xlu0 %167
        %v169 = vsel %vm166, %v168, %v153
        %170 = vrot.lane.b32.xlu0 %v154, 16
        %v171 = vpop.permute.xlu0 %170
        %v172 = vsel %vm166, %v171, %v154
        %173 = vrot.lane.b32.xlu0 %v169, 16
        %v174 = vpop.permute.xlu0 %173
        %175 = vrot.lane.b32.xlu0 %v172, 16
        %v176 = vpop.permute.xlu0 %175
        %v177 = vsel %vm166, %v174, %v153
        %v178 = vsel %vm166, %v176, %v154
        %181 = vrot.lane.b32.xlu0 %v153, 1
        %v182 = vpop.permute.xlu0 %181
        %183 = vrot.lane.b32.xlu0 %v154, 1
        %v184 = vpop.permute.xlu0 %183
        %v187 = vsub.f32 %v177, %v182
        %v188 = vsub.f32 %v178, %v184
        %v189 = vand.u32 2147483647, %v187
        %v190 = vand.u32 2147483647, %v188
        %v191 = vadd.f32 %v164, 0.0
        %v192 = vadd.f32 %v165, 0.0
        %v193 = vadd.f32 %v189, 0.0
        %v194 = vadd.f32 %v190, 0.0
        %s195 = scalar_lea.vmem %s133, 16 [#allocation2]
        %v196 = vld [vmem:[%s195] sm:$0xff]
        %v197 = vld [vmem:[%s195 + $0x8] sm:$0xff]
        %v198 = vrot.slane %v196, 1
        %v199 = vrot.slane %v197, 1
        %v200 = vsel %vm159, %v198, %v199
        %v201 = vsel %vm159, %v199, %v198
        %v202 = vsub.f32 %v200, %v196
        %v203 = vsub.f32 %v201, %v197
        %v204 = vand.u32 2147483647, %v202
        %v205 = vand.u32 2147483647, %v203
        %206 = vrot.lane.b32.xlu0 %v196, 16
        %v207 = vpop.permute.xlu0 %206
        %v208 = vsel %vm166, %v207, %v196
        %209 = vrot.lane.b32.xlu0 %v197, 16
        %v210 = vpop.permute.xlu0 %209
        %v211 = vsel %vm166, %v210, %v197
        %212 = vrot.lane.b32.xlu0 %v208, 16
        %v213 = vpop.permute.xlu0 %212
        %214 = vrot.lane.b32.xlu0 %v211, 16
        %v215 = vpop.permute.xlu0 %214
        %v216 = vsel %vm166, %v213, %v196
        %v217 = vsel %vm166, %v215, %v197
        %220 = vrot.lane.b32.xlu0 %v196, 1
        %v221 = vpop.permute.xlu0 %220
        %222 = vrot.lane.b32.xlu0 %v197, 1
        %v223 = vpop.permute.xlu0 %222
        %v226 = vsub.f32 %v216, %v221
        %v227 = vsub.f32 %v217, %v223
        %v228 = vand.u32 2147483647, %v226
        %v229 = vand.u32 2147483647, %v227
        %v230 = vadd.f32 %v191, %v204
        %v231 = vadd.f32 %v192, %v205
        %v232 = vadd.f32 %v193, %v228
        %v233 = vadd.f32 %v194, %v229
        %s234 = scalar_lea.vmem %s133, 32 [#allocation2]
        %v235 = vld [vmem:[%s234] sm:$0xff]
        %v236 = vld [vmem:[%s234 + $0x8] sm:$0xff]
        %v237 = vrot.slane %v235, 1
        %v238 = vrot.slane %v236, 1
        %v239 = vsel %vm159, %v237, %v238
        %v240 = vsel %vm159, %v238, %v237
        %v241 = vsub.f32 %v239, %v235
        %v242 = vsub.f32 %v240, %v236
        %v243 = vand.u32 2147483647, %v241
        %v244 = vand.u32 2147483647, %v242
        %245 = vrot.lane.b32.xlu0 %v235, 16
        %v246 = vpop.permute.xlu0 %245
        %v247 = vsel %vm166, %v246, %v235
        %248 = vrot.lane.b32.xlu0 %v236, 16
        %v249 = vpop.permute.xlu0 %248
        %v250 = vsel %vm166, %v249, %v236
        %251 = vrot.lane.b32.xlu0 %v247, 16
        %v252 = vpop.permute.xlu0 %251
        %253 = vrot.lane.b32.xlu0 %v250, 16
        %v254 = vpop.permute.xlu0 %253
        %v255 = vsel %vm166, %v252, %v235
        %v256 = vsel %vm166, %v254, %v236
        %259 = vrot.lane.b32.xlu0 %v235, 1
        %v260 = vpop.permute.xlu0 %259
        %261 = vrot.lane.b32.xlu0 %v236, 1
        %v262 = vpop.permute.xlu0 %261
        %v265 = vsub.f32 %v255, %v260
        %v266 = vsub.f32 %v256, %v262
        %v267 = vand.u32 2147483647, %v265
        %v268 = vand.u32 2147483647, %v266
        %v269 = vadd.f32 %v230, %v243
        %v270 = vadd.f32 %v231, %v244
        %v271 = vadd.f32 %v232, %v267
        %v272 = vadd.f32 %v233, %v268
        %s273 = scalar_lea.vmem %s133, 48 [#allocation2]
        %v274 = vld [vmem:[%s273] sm:$0xff]
        %v275 = vld [vmem:[%s273 + $0x8] sm:$0xff]
        %v276 = vrot.slane %v274, 1
        %v277 = vrot.slane %v275, 1
        %v278 = vsel %vm159, %v276, %v277
        %v279 = vsel %vm159, %v277, %v276
        %v280 = vsub.f32 %v278, %v274
        %v281 = vsub.f32 %v279, %v275
        %v282 = vand.u32 2147483647, %v280
        %v283 = vand.u32 2147483647, %v281
        %284 = vrot.lane.b32.xlu0 %v274, 16
        %v285 = vpop.permute.xlu0 %284
        %v286 = vsel %vm166, %v285, %v274
        %287 = vrot.lane.b32.xlu0 %v275, 16
        %v288 = vpop.permute.xlu0 %287
        %v289 = vsel %vm166, %v288, %v275
        %290 = vrot.lane.b32.xlu0 %v286, 16
        %v291 = vpop.permute.xlu0 %290
        %292 = vrot.lane.b32.xlu0 %v289, 16
        %v293 = vpop.permute.xlu0 %292
        %v294 = vsel %vm166, %v291, %v274
        %v295 = vsel %vm166, %v293, %v275
        %298 = vrot.lane.b32.xlu0 %v274, 1
        %v299 = vpop.permute.xlu0 %298
        %300 = vrot.lane.b32.xlu0 %v275, 1
        %v301 = vpop.permute.xlu0 %300
        %v304 = vsub.f32 %v294, %v299
        %v305 = vsub.f32 %v295, %v301
        %v306 = vand.u32 2147483647, %v304
        %v307 = vand.u32 2147483647, %v305
        %v308 = vadd.f32 %v269, %v282
        %v309 = vadd.f32 %v270, %v283
        %v310 = vadd.f32 %v271, %v306
        %v311 = vadd.f32 %v272, %v307
        %v312 = vadd.s32 %v158, 8
        %v313 = vlaneseq
        %v314 = vand.u32 %v313, 127
        %vm315 = vcmp.eq.s32.totalorder %v158, 15
        %vm316 = vcmp.eq.s32.totalorder %v312, 15
        %v317 = vsel %vm315, 0.0, %v308
        %v318 = vsel %vm316, 0.0, %v309
        %vm319 = vcmp.ge.s32.totalorder %v314, 15
        %322 = vrot.lane.b32.xlu0 %v310, 127
        %v323 = vpop.permute.xlu0 %322
        %324 = vrot.lane.b32.xlu0 %v311, 127
        %v325 = vpop.permute.xlu0 %324
        %v328 = vsel %vm319, 0.0, %v323
        %v329 = vsel %vm319, 0.0, %v325
        %v330 = vrot.slane %v317, 7
        %v331 = vrot.slane %v318, 7
        %vm332 = vcmp.lt.s32.totalorder %v158, 1
        %v333 = vsel %vm332, %v330, %v331
        %v334 = vsel %vm332, %v331, %v330
        %v335 = vadd.f32 %v317, %v334
        %v336 = vadd.f32 %v318, %v333
        %337 = vrot.lane.b32.xlu0 %v328, 16
        %v338 = vpop.permute.xlu0 %337
        %v339 = vsel %vm166, %v338, %v328
        %340 = vrot.lane.b32.xlu0 %v329, 16
        %v341 = vpop.permute.xlu0 %340
        %v342 = vsel %vm166, %v341, %v329
        %343 = vrot.lane.b32.xlu0 %v339, 16
        %v344 = vpop.permute.xlu0 %343
        %345 = vrot.lane.b32.xlu0 %v342, 16
        %v346 = vpop.permute.xlu0 %345
        %v347 = vsel %vm166, %v344, %v328
        %v348 = vsel %vm166, %v346, %v329
        %351 = vrot.lane.b32.xlu0 %v347, 113
        %v352 = vpop.permute.xlu0 %351
        %353 = vrot.lane.b32.xlu0 %v348, 113
        %v354 = vpop.permute.xlu0 %353
        %v357 = vadd.f32 %v328, %v352
        %v358 = vadd.f32 %v329, %v354
        %vm359 = vcmp.ge.s32.totalorder %v158, 1
        %vm360 = vcmp.ge.s32.totalorder %v312, 1
        %vm361 = vcmp.le.s32.totalorder %v158, 14
        %vm362 = vcmp.le.s32.totalorder %v312, 14
        %vm363 = vmand %vm359, %vm361
        %vm364 = vmand %vm360, %vm362
        %v365 = vsel %vm363, 0.5, 1.0
        %v366 = vsel %vm364, 0.5, 1.0
        %vm367 = vcmp.ge.s32.totalorder %v314, 1
        %vm368 = vcmp.le.s32.totalorder %v314, 14
        %vm369 = vmand %vm367, %vm368
        %v370 = vsel %vm369, 0.5, 1.0
        %v371 = vmul.f32 %v335, %v365
        %v372 = vmul.f32 %v336, %v366
        %v373 = vmul.f32 %v357, %v370
        %v374 = vmul.f32 %v358, %v370
        %v375 = vadd.f32 %v371, %v373
        %v376 = vadd.f32 %v372, %v374
        %vm377 = vcmask 130048
        %378 = vst.msk [vmem:[%s151] sm:$0xff] %vm377, %v375
        %379 = vst.msk [vmem:[%s151 + $0x8] sm:$0xff] %vm377, %v376
        %s380 = sand.u32 %s66, 1
        %s381 = scalar_lea.sflag [#allocation4], %s380
        %s382 = sand.u32 %s66, 1
        %s383 = smul.addr %s382, 16
        %s384 = scalar_lea.vmem [#allocation5], %s383
        // Predicated region
        $region29: #{tpu_custom_call.1} parent=23 // pred_check
          %p385 = pneg %p76
        $region30: #{tpu_custom_call.1} parent=23 // pred_check_branch
          %387 = sbr.rel (%p385) target = $region32
        $region31: #{tpu_custom_call.1} parent=23 // pred_region
          %s389 = ssub.s32 256, 256
          %390 = vsyncadd %s381, %s389
          %s391 = smul.addr %s22, 2
          %s392 = smul.addr %s391, 128
          %s393 = scalar_lea.hbm %s1, %s392
          %s394 = sshll.u32 %s384, 4
          %s395 = int_to_ptr.vmem [resolvable:$true] %s394
          %400 = dma.vmem_to_hbm [thread:$0]  %s395, 256, %s393, %s381, 128, 128, 8
        $region32: #{tpu_custom_call.1} parent=23 // pred_fallthru
          _
      $region24: #{tpu_custom_call.1} parent=5 // pred_fallthru
        _
      %p401 = scmp.le.s32.totalorder 2, %s13
      // Predicated region
      $region33: #{tpu_custom_call.1} parent=5 // pred_check
        %p402 = pneg %p401
      $region34: #{tpu_custom_call.1} parent=5 // pred_check_branch
        %404 = sbr.rel (%p402) target = $region36
      $region35: #{tpu_custom_call.1} parent=5 // pred_region
        %s405 = ssub.s32 %s13, 2
        // Predicated region
        $region37: #{tpu_custom_call.1} parent=35 // pred_check
          %p406 = pneg %p82
        $region38: #{tpu_custom_call.1} parent=35 // pred_check_branch
          %408 = sbr.rel (%p406) target = $region40
        $region39: #{tpu_custom_call.1} parent=35 // pred_region
          %s409 = sand.u32 %s67, 1
          %s410 = scalar_lea.sflag [#allocation4], %s409
          %s411 = sand.u32 %s67, 1
          %s412 = smul.addr %s411, 16
          %s413 = scalar_lea.vmem [#allocation5], %s412
          %414 = dma.done %s410, 256
        $region40: #{tpu_custom_call.1} parent=35 // pred_fallthru
          _
      $region36: #{tpu_custom_call.1} parent=5 // pred_fallthru
        _
    $region6: #{tpu_custom_call.1} parent=1 // loop_footer
      %s17 = sadd.s32 1, %s13
    $region7: #{tpu_custom_call.1} parent=1 // loop_footer_branch
      %12 = sbr.rel target = $region3
    $region8: #{tpu_custom_call.1} parent=1 // loop_exit
      _
    %415 = vsyncpa [#allocation3], 1
    %s416 = scalar_lea.sflag [#allocation3], 1
    %417 = vsyncpa %s416, 1
    %418 = vsyncpa [#allocation4], 1
    %s419 = scalar_lea.sflag [#allocation4], 1
    %420 = vsyncpa %s419, 1

</llo_original>
